<compile_context>
chip_gen: v7x
topology: tpu7x:2x2x1
jax: 0.10.0
libtpu: 0.0.40
codegen_flags: <defaults>
</compile_context>

<pallas_src>
import functools

import jax
import jax.numpy as jnp
from jax.experimental import pallas as pl
from jax.experimental.pallas import tpu as pltpu


def _round_up(x, m):
    return (x + m - 1) // m * m


def _choose_batch_tile(B, HW):
    """Fold batch into the matmul M-dim when images are small (M < 256), but
    keep >= 2 grid steps so both v7x TensorCores get work."""
    Bt = 1
    while Bt * HW < 256 and B % (2 * Bt) == 0 and B // (2 * Bt) >= 2:
        Bt *= 2
    return Bt


# ----------------------------------------------------------------------------
# Fused Pallas kernel: conv3x3(+bias,+ReLU) -> global avg pool -> head -> act
# ----------------------------------------------------------------------------

def fused_timm_kernel(x_ref, wt_ref, cb_ref, fw_ref, fb_ref, pmat_ref, *out_refs,
                      Bt, HW, inv_hw, num_classes, activation, with_features):
    """Bt images per grid step; conv is one (Bt*HW, K_p) @ (K_p, Cout_p) matmul."""
    K_p = wt_ref.shape[0]

    # --- conv3x3 as ONE lane-dense bf16 matmul (f32 accumulation) -------------
    if Bt == 1:
        lhs = x_ref[0]                                   # (HW, K_p) bf16
    else:
        lhs = x_ref[...].reshape(Bt * HW, K_p)           # tile-aligned merge, free
    acc = jnp.dot(lhs, wt_ref[...], preferred_element_type=jnp.float32)
    acc = jnp.maximum(acc + cb_ref[...], 0.0)            # bias + ReLU, f32 on VPU

    # --- global average pool on the MXU ---------------------------------------
    # pmat is a constant block-diagonal ones matrix (Bt, Bt*HW); scaling by
    # 1/(H*W) is applied afterwards in f32 (exact for any H*W).
    pooled = jnp.dot(pmat_ref[...], acc.astype(jnp.bfloat16),
                     preferred_element_type=jnp.float32) * inv_hw   # (Bt, Cout_p)

    out_ref = out_refs[0]
    if with_features:
        out_refs[1][0] = pooled.astype(out_refs[1].dtype)

    # --- linear head (bf16 operands, f32 accumulate) + optional activation ----
    logits = jnp.dot(pooled.astype(jnp.bfloat16), fw_ref[...],
                     preferred_element_type=jnp.float32) + fb_ref[...]  # (Bt, Nc_p)

    if activation == "softmax":
        cls = jax.lax.broadcasted_iota(jnp.int32, logits.shape, 1)
        logits = jnp.where(cls < num_classes, logits, -1e30)   # mask padded classes
        m = jnp.max(logits, axis=1, keepdims=True)
        e = jnp.exp(logits - m)
        out = e / jnp.sum(e, axis=1, keepdims=True)            # exact simplex
    elif activation == "sigmoid":
        out = pl.reciprocal(1.0 + jnp.exp(-logits), approx=True)
    else:
        out = logits
    out_ref[0] = out.astype(out_ref.dtype)


# ----------------------------------------------------------------------------
# Wrapper (layout plumbing + pallas_call)
# ----------------------------------------------------------------------------

def timm_model_forward(x_nchw, params, activate=False, with_features=False):
    num_classes = int(params["num_classes"])
    conv_w, conv_b = params["conv_w"], params["conv_b"]
    fc_w, fc_b = params["fc_w"], params["fc_b"]

    B, Cin, H, W = x_nchw.shape
    Cout = conv_w.shape[0]
    HW = H * W
    K = 9 * Cin
    K_p = _round_up(K, 128)
    Cout_p = _round_up(Cout, 128)
    Nc_p = _round_up(num_classes, 128)

    Bt = _choose_batch_tile(B, HW)
    G = B // Bt

    # ---- wrapper-side im2col (cheap layout plumbing, bf16) -------------------
    x_nhwc = jnp.transpose(x_nchw, (0, 2, 3, 1))                    # (B,H,W,Cin)
    x_pad = jnp.pad(x_nhwc, ((0, 0), (1, 1), (1, 1), (0, 0)))
    taps = [x_pad[:, dy:dy + H, dx:dx + W, :] for dy in range(3) for dx in range(3)]
    x_col = jnp.concatenate(taps, axis=-1).reshape(B, HW, K)        # (B, HW, 9*Cin)
    x_col = jnp.pad(x_col, ((0, 0), (0, 0), (0, K_p - K))).astype(jnp.bfloat16)

    # weights -> (K, Cout), tap-major / channel-minor to match the im2col layout
    wt = jnp.transpose(conv_w, (2, 3, 1, 0)).reshape(K, Cout)
    wt = jnp.pad(wt, ((0, K_p - K), (0, Cout_p - Cout))).astype(jnp.bfloat16)
    cb = jnp.pad(conv_b, (0, Cout_p - Cout)).reshape(1, Cout_p).astype(jnp.float32)
    fw = jnp.pad(fc_w, ((0, Cout_p - Cout), (0, Nc_p - num_classes))).astype(jnp.bfloat16)
    fb = jnp.pad(fc_b, (0, Nc_p - num_classes)).reshape(1, Nc_p).astype(jnp.float32)

    # constant block-diagonal pooling matrix: pmat[i, r] = 1 iff row r belongs to image i
    img_of_col = jnp.arange(Bt * HW, dtype=jnp.int32)[None, :] // HW
    pmat = (jnp.arange(Bt, dtype=jnp.int32)[:, None] == img_of_col).astype(jnp.bfloat16)

    if activate:
        activation = "softmax" if num_classes > 1 else "sigmoid"
    else:
        activation = "none"

    kernel = functools.partial(
        fused_timm_kernel, Bt=Bt, HW=HW, inv_hw=1.0 / float(HW),
        num_classes=num_classes, activation=activation, with_features=with_features)

    out_shapes = [jax.ShapeDtypeStruct((G, Bt, Nc_p), jnp.float32)]
    out_specs = [pl.BlockSpec((1, Bt, Nc_p), lambda g: (g, 0, 0))]
    if with_features:
        out_shapes.append(jax.ShapeDtypeStruct((G, Bt, Cout_p), jnp.float32))
        out_specs.append(pl.BlockSpec((1, Bt, Cout_p), lambda g: (g, 0, 0)))

    flops = G * (2 * Bt * HW * K_p * Cout_p        # conv matmul
                 + 2 * Bt * Bt * HW * Cout_p        # pooling matmul
                 + 2 * Bt * Cout_p * Nc_p)          # head matmul
    bytes_accessed = (B * HW * K_p * 2 + K_p * Cout_p * 2 + Cout_p * Nc_p * 2
                      + (Cout_p + Nc_p) * 4 + Bt * Bt * HW * 2
                      + B * (Nc_p + (Cout_p if with_features else 0)) * 4)

    # NOTE: wt/cb/fw/fb/pmat use constant index_maps (DMA'd once). At real
    # backbone sizes add pipeline_mode=pl.Buffered(1) to keep them single-buffered.
    res = pl.pallas_call(
        kernel,
        out_shape=tuple(out_shapes) if with_features else out_shapes[0],
        grid=(G,),
        in_specs=[
            pl.BlockSpec((Bt, HW, K_p), lambda g: (g, 0, 0)),
            pl.BlockSpec((K_p, Cout_p), lambda g: (0, 0)),
            pl.BlockSpec((1, Cout_p), lambda g: (0, 0)),
            pl.BlockSpec((Cout_p, Nc_p), lambda g: (0, 0)),
            pl.BlockSpec((1, Nc_p), lambda g: (0, 0)),
            pl.BlockSpec((Bt, Bt * HW), lambda g: (0, 0)),
        ],
        out_specs=tuple(out_specs) if with_features else out_specs[0],
        compiler_params=pltpu.CompilerParams(
            dimension_semantics=("parallel",),
            vmem_limit_bytes=32 * 1024 * 1024,
        ),
        cost_estimate=pl.CostEstimate(
            flops=flops, transcendentals=B * Nc_p, bytes_accessed=bytes_accessed),
    )(x_col, wt, cb, fw, fb, pmat)

    if with_features:
        out, pooled = res
        logits = out.reshape(B, Nc_p)[:, :num_classes]
        feats = pooled.reshape(B, Cout_p)[:, :Cout]
        # forward(..., with_feautres=True) returns (x, pool(features))
        return logits, feats
    return res.reshape(B, Nc_p)[:, :num_classes]


# ----------------------------------------------------------------------------
# Parameters + pure-JAX reference (for in-script validation)
# ----------------------------------------------------------------------------

def init_params(key, cin=4, cout=32, num_classes=8):
    k1, k2, k3, k4 = jax.random.split(key, 4)
    scale_conv = 1.0 / jnp.sqrt(cin * 9.0)
    scale_fc = 1.0 / jnp.sqrt(float(cout))
    return {
        "conv_w": jax.random.normal(k1, (cout, cin, 3, 3), jnp.float32) * scale_conv,
        "conv_b": jax.random.normal(k2, (cout,), jnp.float32) * scale_conv,
        "fc_w": jax.random.normal(k3, (cout, num_classes), jnp.float32) * scale_fc,
        "fc_b": jax.random.normal(k4, (num_classes,), jnp.float32) * scale_fc,
        "num_classes": num_classes,
    }


def reference_forward(x_nchw, params, activate=False, with_features=False):
    """Pure-JAX reference. MXU operands (x, conv_w, fc_w) are rounded to bf16 to
    mirror the kernel's bf16-operand / f32-accumulate matmuls."""
    num_classes = int(params["num_classes"])
    xr = x_nchw.astype(jnp.bfloat16).astype(jnp.float32)
    wr = params["conv_w"].astype(jnp.bfloat16).astype(jnp.float32)
    fwr = params["fc_w"].astype(jnp.bfloat16).astype(jnp.float32)
    y = jax.lax.conv_general_dilated(
        xr, wr, window_strides=(1, 1), padding=((1, 1), (1, 1)),
        dimension_numbers=("NCHW", "OIHW", "NCHW"))
    y = jnp.maximum(y + params["conv_b"][None, :, None, None], 0.0)
    pooled = jnp.mean(y, axis=(2, 3))
    logits = pooled @ fwr + params["fc_b"]
    if activate:
        logits = (jax.nn.softmax(logits, axis=1) if num_classes > 1
                  else jax.nn.sigmoid(logits))
    if with_features:
        return logits, pooled
    return logits


if __name__ == "__main__":
    key = jax.random.PRNGKey(0)
    kx, kp = jax.random.split(key)

    B, Cin, H, W = 2, 4, 16, 16
    Cout, num_classes = 32, 8

    x = jax.random.normal(kx, (B, Cin, H, W), jnp.float32)   # NCHW (PyTorch convention)
    params = init_params(kp, cin=Cin, cout=Cout, num_classes=num_classes)

    # --- activate=True, with_features=True path -------------------------------
    probs, feats = timm_model_forward(x, params, activate=True, with_features=True)
    probs = jax.block_until_ready(probs)
    feats = jax.block_until_ready(feats)

    assert probs.shape == (B, num_classes)
    assert feats.shape == (B, Cout)
    assert jnp.allclose(jnp.sum(probs, axis=1), 1.0, atol=1e-3)   # exact normalization

    ref_probs, ref_feats = reference_forward(x, params, activate=True, with_features=True)
    assert jnp.allclose(probs, ref_probs, atol=2e-2, rtol=2e-2)
    assert jnp.allclose(feats, ref_feats, atol=2e-2, rtol=2e-2)

    # --- plain logits path (no pooled-features output emitted) ----------------
    logits = timm_model_forward(x, params, activate=False, with_features=False)
    logits = jax.block_until_ready(logits)
    ref_logits = reference_forward(x, params, activate=False, with_features=False)
    assert logits.shape == (B, num_classes)
    assert jnp.allclose(logits, ref_logits, atol=2e-2, rtol=2e-2)

    print("KERNEL_OK")
</pallas_src>

<mosaic_0001>
module attributes {stable_mosaic.version = 11 : i64} {
  func.func @fused_timm_kernel(%arg0: i32, %arg1: memref<1x256x128xbf16, #tpu.memory_space<vmem>>, %arg2: memref<128x128xbf16, #tpu.memory_space<vmem>>, %arg3: memref<1x128xf32, #tpu.memory_space<vmem>>, %arg4: memref<128x128xbf16, #tpu.memory_space<vmem>>, %arg5: memref<1x128xf32, #tpu.memory_space<vmem>>, %arg6: memref<1x256xbf16, #tpu.memory_space<vmem>>, %arg7: memref<1x1x128xf32, #tpu.memory_space<vmem>>, %arg8: memref<1x1x128xf32, #tpu.memory_space<vmem>>) attributes {dimension_semantics = [#tpu.dimension_semantics<parallel>], iteration_bounds = array<i64: 2>, scalar_prefetch = 0 : i64, scratch_operands = 0 : i64, tpu.core_type = #tpu.core_type<tc>, window_params = [{transform_indices = @transform_0, window_bounds = array<i64: 1, 256, 128>}, {pipeline_mode = #tpu.pipeline_mode<synchronous>, transform_indices = @transform_1, window_bounds = array<i64: 128, 128>}, {pipeline_mode = #tpu.pipeline_mode<synchronous>, transform_indices = @transform_2, window_bounds = array<i64: 1, 128>}, {pipeline_mode = #tpu.pipeline_mode<synchronous>, transform_indices = @transform_3, window_bounds = array<i64: 128, 128>}, {pipeline_mode = #tpu.pipeline_mode<synchronous>, transform_indices = @transform_4, window_bounds = array<i64: 1, 128>}, {pipeline_mode = #tpu.pipeline_mode<synchronous>, transform_indices = @transform_5, window_bounds = array<i64: 1, 256>}, {transform_indices = @transform_6, window_bounds = array<i64: 1, 1, 128>}, {transform_indices = @transform_7, window_bounds = array<i64: 1, 1, 128>}]} {
    %c0 = arith.constant 0 : index
    %c0_0 = arith.constant 0 : index
    %c0_1 = arith.constant 0 : index
    %0 = vector.load %arg1[%c0, %c0_0, %c0_1] : memref<1x256x128xbf16, #tpu.memory_space<vmem>>, vector<1x256x128xbf16>
    %1 = vector.shape_cast %0 : vector<1x256x128xbf16> to vector<256x128xbf16>
    %c0_2 = arith.constant 0 : index
    %c0_3 = arith.constant 0 : index
    %2 = vector.load %arg2[%c0_2, %c0_3] : memref<128x128xbf16, #tpu.memory_space<vmem>>, vector<128x128xbf16>
    %cst = arith.constant dense<0.000000e+00> : vector<256x128xf32>
    %3 = tpu.matmul %1, %2, %cst {dimension_numbers = #tpu.dot_dimension_numbers<[1], [0], [0], [1], [0, 0, 1, 1], [], []>} : vector<256x128xbf16>, vector<128x128xbf16>, vector<256x128xf32> -> vector<256x128xf32>
    %c0_4 = arith.constant 0 : index
    %c0_5 = arith.constant 0 : index
    %4 = vector.load %arg3[%c0_4, %c0_5] : memref<1x128xf32, #tpu.memory_space<vmem>>, vector<1x128xf32>
    %5 = vector.broadcast %4 : vector<1x128xf32> to vector<256x128xf32>
    %6 = arith.addf %3, %5 : vector<256x128xf32>
    %cst_6 = arith.constant 0.000000e+00 : f32
    %7 = vector.broadcast %cst_6 : f32 to vector<256x128xf32>
    %8 = arith.maximumf %6, %7 : vector<256x128xf32>
    %c0_7 = arith.constant 0 : index
    %c0_8 = arith.constant 0 : index
    %9 = vector.load %arg6[%c0_7, %c0_8] : memref<1x256xbf16, #tpu.memory_space<vmem>>, vector<1x256xbf16>
    %10 = arith.truncf %8 : vector<256x128xf32> to vector<256x128xbf16>
    %cst_9 = arith.constant dense<0.000000e+00> : vector<1x128xf32>
    %11 = tpu.matmul %9, %10, %cst_9 {dimension_numbers = #tpu.dot_dimension_numbers<[1], [0], [0], [1], [0, 0, 1, 1], [], []>} : vector<1x256xbf16>, vector<256x128xbf16>, vector<1x128xf32> -> vector<1x128xf32>
    %cst_10 = arith.constant 3.906250e-03 : f32
    %12 = vector.broadcast %cst_10 : f32 to vector<1x128xf32>
    %13 = arith.mulf %11, %12 : vector<1x128xf32>
    %c0_11 = arith.constant 0 : index
    %c0_12 = arith.constant 0 : index
    %c0_13 = arith.constant 0 : index
    %14 = vector.load %arg8[%c0_11, %c0_12, %c0_13] : memref<1x1x128xf32, #tpu.memory_space<vmem>>, vector<1x1x128xf32>
    %15 = vector.shape_cast %14 : vector<1x1x128xf32> to vector<1x128xf32>
    %16 = vector.shape_cast %13 : vector<1x128xf32> to vector<1x1x128xf32>
    tpu.vector_store %arg8[%c0_11, %c0_12, %c0_13], %16 {strides = array<i32>} : memref<1x1x128xf32, #tpu.memory_space<vmem>>, vector<1x1x128xf32>,
    %17 = arith.truncf %13 : vector<1x128xf32> to vector<1x128xbf16>
    %c0_14 = arith.constant 0 : index
    %c0_15 = arith.constant 0 : index
    %18 = vector.load %arg4[%c0_14, %c0_15] : memref<128x128xbf16, #tpu.memory_space<vmem>>, vector<128x128xbf16>
    %cst_16 = arith.constant dense<0.000000e+00> : vector<1x128xf32>
    %19 = tpu.matmul %17, %18, %cst_16 {dimension_numbers = #tpu.dot_dimension_numbers<[1], [0], [0], [1], [0, 0, 1, 1], [], []>} : vector<1x128xbf16>, vector<128x128xbf16>, vector<1x128xf32> -> vector<1x128xf32>
    %c0_17 = arith.constant 0 : index
    %c0_18 = arith.constant 0 : index
    %20 = vector.load %arg5[%c0_17, %c0_18] : memref<1x128xf32, #tpu.memory_space<vmem>>, vector<1x128xf32>
    %21 = arith.addf %19, %20 : vector<1x128xf32>
    %22 = tpu.iota {dimensions = array<i32: 1>} : vector<1x128xi32>
    %c8_i32 = arith.constant 8 : i32
    %23 = vector.broadcast %c8_i32 : i32 to vector<1x128xi32>
    %24 = arith.cmpi slt, %22, %23 : vector<1x128xi32>
    %cst_19 = arith.constant -1.000000e+30 : f32
    %25 = vector.broadcast %cst_19 : f32 to vector<1x128xf32>
    %26 = arith.select %24, %21, %25 : vector<1x128xi1>, vector<1x128xf32>
    %cst_20 = arith.constant dense<0xFF800000> : vector<1xf32>
    %27 = vector.multi_reduction <maximumf>, %26, %cst_20 [1] : vector<1x128xf32> to vector<1xf32>
    %28 = vector.shape_cast %27 : vector<1xf32> to vector<1x1xf32>
    %29 = vector.broadcast %28 : vector<1x1xf32> to vector<1x128xf32>
    %30 = arith.subf %26, %29 : vector<1x128xf32>
    %31 = math.exp %30 : vector<1x128xf32>
    %cst_21 = arith.constant dense<0.000000e+00> : vector<1xf32>
    %32 = vector.multi_reduction <add>, %31, %cst_21 [1] : vector<1x128xf32> to vector<1xf32>
    %33 = vector.shape_cast %32 : vector<1xf32> to vector<1x1xf32>
    %34 = vector.broadcast %33 : vector<1x1xf32> to vector<1x128xf32>
    %35 = arith.divf %31, %34 : vector<1x128xf32>
    %c0_22 = arith.constant 0 : index
    %c0_23 = arith.constant 0 : index
    %c0_24 = arith.constant 0 : index
    %36 = vector.load %arg7[%c0_22, %c0_23, %c0_24] : memref<1x1x128xf32, #tpu.memory_space<vmem>>, vector<1x1x128xf32>
    %37 = vector.shape_cast %36 : vector<1x1x128xf32> to vector<1x128xf32>
    %38 = vector.shape_cast %35 : vector<1x128xf32> to vector<1x1x128xf32>
    tpu.vector_store %arg7[%c0_22, %c0_23, %c0_24], %38 {strides = array<i32>} : memref<1x1x128xf32, #tpu.memory_space<vmem>>, vector<1x1x128xf32>,
    return
  }
  func.func @transform_0(%arg0: i32) -> (i32, i32, i32) {
    %c0_i32 = arith.constant 0 : i32
    %c0_i32_0 = arith.constant 0 : i32
    %c0_i32_1 = arith.constant 0 : i32
    return %arg0, %c0_i32, %c0_i32_0 : i32, i32, i32
  }
  func.func @transform_1(%arg0: i32) -> (i32, i32) {
    %c0_i32 = arith.constant 0 : i32
    %c0_i32_0 = arith.constant 0 : i32
    %c0_i32_1 = arith.constant 0 : i32
    return %c0_i32, %c0_i32_0 : i32, i32
  }
  func.func @transform_2(%arg0: i32) -> (i32, i32) {
    %c0_i32 = arith.constant 0 : i32
    %c0_i32_0 = arith.constant 0 : i32
    %c0_i32_1 = arith.constant 0 : i32
    return %c0_i32, %c0_i32_0 : i32, i32
  }
  func.func @transform_3(%arg0: i32) -> (i32, i32) {
    %c0_i32 = arith.constant 0 : i32
    %c0_i32_0 = arith.constant 0 : i32
    %c0_i32_1 = arith.constant 0 : i32
    return %c0_i32, %c0_i32_0 : i32, i32
  }
  func.func @transform_4(%arg0: i32) -> (i32, i32) {
    %c0_i32 = arith.constant 0 : i32
    %c0_i32_0 = arith.constant 0 : i32
    %c0_i32_1 = arith.constant 0 : i32
    return %c0_i32, %c0_i32_0 : i32, i32
  }
  func.func @transform_5(%arg0: i32) -> (i32, i32) {
    %c0_i32 = arith.constant 0 : i32
    %c0_i32_0 = arith.constant 0 : i32
    %c0_i32_1 = arith.constant 0 : i32
    return %c0_i32, %c0_i32_0 : i32, i32
  }
  func.func @transform_6(%arg0: i32) -> (i32, i32, i32) {
    %c0_i32 = arith.constant 0 : i32
    %c0_i32_0 = arith.constant 0 : i32
    %c0_i32_1 = arith.constant 0 : i32
    return %arg0, %c0_i32, %c0_i32_0 : i32, i32, i32
  }
  func.func @transform_7(%arg0: i32) -> (i32, i32, i32) {
    %c0_i32 = arith.constant 0 : i32
    %c0_i32_0 = arith.constant 0 : i32
    %c0_i32_1 = arith.constant 0 : i32
    return %arg0, %c0_i32, %c0_i32_0 : i32, i32, i32
  }
}

</mosaic_0001>

<llo_original>
// kernel: tpu_custom_call.1
$region0: #{tpu_custom_call.1}
  #allocation0 [shape = 'u32[]', space=smem, size = 0x4, offset = 0x4, fixed_abs, tag = 'smem constant byte address 0x4 - core index']
  #allocation1 [shape = 'u32[144,128]{1,0:T(1,128)}', space=vmem, size = 0x12000, scoped, tag = 'internal scratch']
  %s0 = inlined_call_operand.hbm [shape: bf16[2,256,128], index: 0, kind: input, shape index: {}]
  %s1 = inlined_call_operand.hbm [shape: bf16[128,128], index: 1, kind: input, shape index: {}]
  %s2 = inlined_call_operand.vmem [shape: f32[1,128], index: 2, kind: input, shape index: {}]
  %s3 = inlined_call_operand.hbm [shape: bf16[128,128], index: 3, kind: input, shape index: {}]
  %s4 = inlined_call_operand.vmem [shape: f32[1,128], index: 4, kind: input, shape index: {}]
  %s5 = inlined_call_operand.vmem [shape: bf16[1,256], index: 5, kind: input, shape index: {}]
  %s6 = inlined_call_operand.hbm [shape: f32[2,1,128], index: 6, kind: output, shape index: {0}]
  %s7 = inlined_call_operand.hbm [shape: f32[2,1,128], index: 7, kind: output, shape index: {1}]
  %8 = xla_tuple %s6, %s7
  %s9 = sld [smem:[#allocation0]]
  $region77: #{tpu_custom_call.1} parent=0
    _
  %s11 = ssub.s32 1, %s9
  %s12 = scalar_select 0, %s11, %s9
  $region1: #{tpu_custom_call.1} parent=0
    #allocation2 [shape = 'u8[131072]{0}', space=vmem, size = 0x20000, scoped, tag = 'input window, operand 0']
    #allocation3 [shape = 's32[2]{0}', space=sflag, size = 0x8, scoped, tag = 'scoped memory for tpu_custom_call.1']
    #allocation4 [shape = 's32[2]{0}', space=sflag, size = 0x8, scoped, tag = 'scoped memory for tpu_custom_call.1']
    #allocation5 [shape = 'u8[32768]{0}', space=vmem, size = 0x8000, scoped, tag = 'input window, operand 1, single buffered']
    #allocation6 [shape = 's32[1]{0}', space=sflag, size = 0x4, scoped, tag = 'scoped memory for tpu_custom_call.1']
    #allocation7 [shape = 'u8[32768]{0}', space=vmem, size = 0x8000, scoped, tag = 'input window, operand 3, single buffered']
    #allocation8 [shape = 'u8[1024]{0}', space=vmem, size = 0x400, scoped, tag = 'output window, operand 0']
    #allocation9 [shape = 'u8[1024]{0}', space=vmem, size = 0x400, scoped, tag = 'output window, operand 1']
    #allocation10 [shape = 's32[2]{0}', space=sflag, size = 0x8, scoped, tag = 'scoped memory for tpu_custom_call.1']
    %13 = vsyncpa [#allocation3], 0
    %s14 = scalar_lea.sflag [#allocation3], 1
    %15 = vsyncpa %s14, 0
    %16 = vsyncpa [#allocation6], 0
    %17 = vsyncpa [#allocation4], 0
    %s18 = scalar_lea.sflag [#allocation4], 1
    %19 = vsyncpa %s18, 0
    %20 = vsyncpa [#allocation10], 0
    %s21 = scalar_lea.sflag [#allocation10], 1
    %22 = vsyncpa %s21, 0
    loop: start=0, step=1, limit=4
    $region2: #{tpu_custom_call.1} parent=1 // loop_pre_header
      _
    $region3: #{tpu_custom_call.1} parent=1 // loop_header
      %s24 = sphi 0, %s28
      %p25 = scmp.ge.s32.totalorder %s24, 4
      %s34 = sphi 0, %s36
      %s37 = sphi 0, %s34
      %s38 = sphi 0, %s37
      %s54 = sphi 0, %s38
      %s58 = sphi 0, %s58
      %s60 = sphi 0, %s58
      %s61 = sphi 0, %s60
      %s75 = sphi 0, %s61
      %s79 = sphi 0, %s79
      %s81 = sphi 0, %s79
      %s82 = sphi 0, %s81
      %s96 = sphi 0, %s82
      %s100 = sphi 0, %s100
      %s102 = sphi 0, %s100
      %s103 = sphi 0, %s102
      %s117 = sphi 0, %s103
      %s121 = sphi 0, %s121
      %s123 = sphi 0, %s121
      %s124 = sphi 0, %s123
      %s138 = sphi 0, %s124
      %s142 = sphi 0, %s142
      %s144 = sphi 0, %s142
      %s145 = sphi 0, %s144
      %s159 = sphi 0, %s145
      %s165 = sphi 0, %s167
      %s168 = sphi 0, %s165
      %s169 = sphi 0, %s168
      %s185 = sphi 0, %s169
      %s191 = sphi 0, %s193
      %s194 = sphi 0, %s191
      %s195 = sphi 0, %s194
      %s211 = sphi 0, %s195
    $region4: #{tpu_custom_call.1} parent=1 // loop_header_branch
      %27 = sbr.rel (%p25) target = $region8
    $region5: #{tpu_custom_call.1} parent=1 // loop_body
      %s29 = ssub.s32 %s24, 1
      %s30 = ssub.s32 %s24, 2
      %s31 = sadd.s32 %s24, 1
      %s32 = ssub.s32 %s24, %s31
      %p33 = scmp.eq.s32.totalorder %s32, 0
      %s35 = sadd.s32 %s34, 1
      %s36 = scalar_select %p33, %s34, %s35
      %p39 = pneg %p33
      %p40 = scmp.eq.s32.totalorder %s24, 1
      %p41 = por %p39, %p40
      %p42 = scmp.ne.s32.totalorder %s34, %s37
      %p43 = scmp.eq.s32.totalorder %s24, 0
      %p44 = por %p42, %p43
      %p45 = scmp.ne.s32.totalorder %s34, %s37
      %p46 = scmp.eq.s32.totalorder %s29, 1
      %p47 = por %p45, %p46
      %p48 = scmp.ne.s32.totalorder %s37, %s38
      %p49 = scmp.eq.s32.totalorder %s29, 0
      %p50 = por %p48, %p49
      %p51 = scmp.ne.s32.totalorder %s37, %s38
      %p52 = scmp.eq.s32.totalorder %s30, 1
      %p53 = por %p51, %p52
      %p55 = scmp.ne.s32.totalorder %s38, %s54
      %p56 = scmp.eq.s32.totalorder %s30, 0
      %p57 = por %p55, %p56
      %s59 = sadd.s32 %s58, 1
      %p62 = scmp.eq.s32.totalorder %s24, 1
      %p63 = scmp.ne.s32.totalorder %s58, %s60
      %p64 = scmp.eq.s32.totalorder %s24, 0
      %p65 = por %p63, %p64
      %p66 = scmp.ne.s32.totalorder %s58, %s60
      %p67 = scmp.eq.s32.totalorder %s29, 1
      %p68 = por %p66, %p67
      %p69 = scmp.ne.s32.totalorder %s60, %s61
      %p70 = scmp.eq.s32.totalorder %s29, 0
      %p71 = por %p69, %p70
      %p72 = scmp.ne.s32.totalorder %s60, %s61
      %p73 = scmp.eq.s32.totalorder %s30, 1
      %p74 = por %p72, %p73
      %p76 = scmp.ne.s32.totalorder %s61, %s75
      %p77 = scmp.eq.s32.totalorder %s30, 0
      %p78 = por %p76, %p77
      %s80 = sadd.s32 %s79, 1
      %p83 = scmp.eq.s32.totalorder %s24, 1
      %p84 = scmp.ne.s32.totalorder %s79, %s81
      %p85 = scmp.eq.s32.totalorder %s24, 0
      %p86 = por %p84, %p85
      %p87 = scmp.ne.s32.totalorder %s79, %s81
      %p88 = scmp.eq.s32.totalorder %s29, 1
      %p89 = por %p87, %p88
      %p90 = scmp.ne.s32.totalorder %s81, %s82
      %p91 = scmp.eq.s32.totalorder %s29, 0
      %p92 = por %p90, %p91
      %p93 = scmp.ne.s32.totalorder %s81, %s82
      %p94 = scmp.eq.s32.totalorder %s30, 1
      %p95 = por %p93, %p94
      %p97 = scmp.ne.s32.totalorder %s82, %s96
      %p98 = scmp.eq.s32.totalorder %s30, 0
      %p99 = por %p97, %p98
      %s101 = sadd.s32 %s100, 1
      %p104 = scmp.eq.s32.totalorder %s24, 1
      %p105 = scmp.ne.s32.totalorder %s100, %s102
      %p106 = scmp.eq.s32.totalorder %s24, 0
      %p107 = por %p105, %p106
      %p108 = scmp.ne.s32.totalorder %s100, %s102
      %p109 = scmp.eq.s32.totalorder %s29, 1
      %p110 = por %p108, %p109
      %p111 = scmp.ne.s32.totalorder %s102, %s103
      %p112 = scmp.eq.s32.totalorder %s29, 0
      %p113 = por %p111, %p112
      %p114 = scmp.ne.s32.totalorder %s102, %s103
      %p115 = scmp.eq.s32.totalorder %s30, 1
      %p116 = por %p114, %p115
      %p118 = scmp.ne.s32.totalorder %s103, %s117
      %p119 = scmp.eq.s32.totalorder %s30, 0
      %p120 = por %p118, %p119
      %s122 = sadd.s32 %s121, 1
      %p125 = scmp.eq.s32.totalorder %s24, 1
      %p126 = scmp.ne.s32.totalorder %s121, %s123
      %p127 = scmp.eq.s32.totalorder %s24, 0
      %p128 = por %p126, %p127
      %p129 = scmp.ne.s32.totalorder %s121, %s123
      %p130 = scmp.eq.s32.totalorder %s29, 1
      %p131 = por %p129, %p130
      %p132 = scmp.ne.s32.totalorder %s123, %s124
      %p133 = scmp.eq.s32.totalorder %s29, 0
      %p134 = por %p132, %p133
      %p135 = scmp.ne.s32.totalorder %s123, %s124
      %p136 = scmp.eq.s32.totalorder %s30, 1
      %p137 = por %p135, %p136
      %p139 = scmp.ne.s32.totalorder %s124, %s138
      %p140 = scmp.eq.s32.totalorder %s30, 0
      %p141 = por %p139, %p140
      %s143 = sadd.s32 %s142, 1
      %p146 = scmp.eq.s32.totalorder %s24, 1
      %p147 = scmp.ne.s32.totalorder %s142, %s144
      %p148 = scmp.eq.s32.totalorder %s24, 0
      %p149 = por %p147, %p148
      %p150 = scmp.ne.s32.totalorder %s142, %s144
      %p151 = scmp.eq.s32.totalorder %s29, 1
      %p152 = por %p150, %p151
      %p153 = scmp.ne.s32.totalorder %s144, %s145
      %p154 = scmp.eq.s32.totalorder %s29, 0
      %p155 = por %p153, %p154
      %p156 = scmp.ne.s32.totalorder %s144, %s145
      %p157 = scmp.eq.s32.totalorder %s30, 1
      %p158 = por %p156, %p157
      %p160 = scmp.ne.s32.totalorder %s145, %s159
      %p161 = scmp.eq.s32.totalorder %s30, 0
      %p162 = por %p160, %p161
      %s163 = ssub.s32 %s24, %s31
      %p164 = scmp.eq.s32.totalorder %s163, 0
      %s166 = sadd.s32 %s165, 1
      %s167 = scalar_select %p164, %s165, %s166
      %p170 = pneg %p164
      %p171 = scmp.eq.s32.totalorder %s24, 1
      %p172 = por %p170, %p171
      %p173 = scmp.ne.s32.totalorder %s165, %s168
      %p174 = scmp.eq.s32.totalorder %s24, 0
      %p175 = por %p173, %p174
      %p176 = scmp.ne.s32.totalorder %s165, %s168
      %p177 = scmp.eq.s32.totalorder %s29, 1
      %p178 = por %p176, %p177
      %p179 = scmp.ne.s32.totalorder %s168, %s169
      %p180 = scmp.eq.s32.totalorder %s29, 0
      %p181 = por %p179, %p180
      %p182 = scmp.ne.s32.totalorder %s168, %s169
      %p183 = scmp.eq.s32.totalorder %s30, 1
      %p184 = por %p182, %p183
      %p186 = scmp.ne.s32.totalorder %s169, %s185
      %p187 = scmp.eq.s32.totalorder %s30, 0
      %p188 = por %p186, %p187
      %s189 = ssub.s32 %s24, %s31
      %p190 = scmp.eq.s32.totalorder %s189, 0
      %s192 = sadd.s32 %s191, 1
      %s193 = scalar_select %p190, %s191, %s192
      %p196 = pneg %p190
      %p197 = scmp.eq.s32.totalorder %s24, 1
      %p198 = por %p196, %p197
      %p199 = scmp.ne.s32.totalorder %s191, %s194
      %p200 = scmp.eq.s32.totalorder %s24, 0
      %p201 = por %p199, %p200
      %p202 = scmp.ne.s32.totalorder %s191, %s194
      %p203 = scmp.eq.s32.totalorder %s29, 1
      %p204 = por %p202, %p203
      %p205 = scmp.ne.s32.totalorder %s194, %s195
      %p206 = scmp.eq.s32.totalorder %s29, 0
      %p207 = por %p205, %p206
      %p208 = scmp.ne.s32.totalorder %s194, %s195
      %p209 = scmp.eq.s32.totalorder %s30, 1
      %p210 = por %p208, %p209
      %p212 = scmp.ne.s32.totalorder %s195, %s211
      %p213 = scmp.eq.s32.totalorder %s30, 0
      %p214 = por %p212, %p213
      %p215 = scmp.le.s32.totalorder 1, %s24
      %p216 = scmp.lt.s32.totalorder %s24, 3
      %p217 = pnand %p215, %p216
      %p218 = pneg %p217
      // Predicated region
      $region9: #{tpu_custom_call.1} parent=5 // pred_check
        _
      $region10: #{tpu_custom_call.1} parent=5 // pred_check_branch
        %220 = sbr.rel (%p217) target = $region12
      $region11: #{tpu_custom_call.1} parent=5 // pred_region
        %s221 = ssub.s32 %s24, 1
        // Predicated region
        $region13: #{tpu_custom_call.1} parent=11 // pred_check
          %p222 = pneg %p71
        $region14: #{tpu_custom_call.1} parent=11 // pred_check_branch
          %224 = sbr.rel (%p222) target = $region16
        $region15: #{tpu_custom_call.1} parent=11 // pred_region
          %s226 = ssub.s32 1024, 1024
          %227 = vsyncadd [#allocation6], %s226
          %s228 = sshll.u32 [#allocation5], 4
          %s229 = int_to_ptr.vmem [resolvable:$true] %s228
          %234 = dma.hbm_to_vmem [thread:$0]  %s1, 1024, %s229, [#allocation6], 64, 64, 4
        $region16: #{tpu_custom_call.1} parent=11 // pred_fallthru
          _
        // Predicated region
        $region17: #{tpu_custom_call.1} parent=11 // pred_check
          %p235 = pneg %p92
        $region18: #{tpu_custom_call.1} parent=11 // pred_check_branch
          %237 = sbr.rel (%p235) target = $region20
        $region19: #{tpu_custom_call.1} parent=11 // pred_region
          _
        $region20: #{tpu_custom_call.1} parent=11 // pred_fallthru
          _
        // Predicated region
        $region21: #{tpu_custom_call.1} parent=11 // pred_check
          %p238 = pneg %p113
        $region22: #{tpu_custom_call.1} parent=11 // pred_check_branch
          %240 = sbr.rel (%p238) target = $region24
        $region23: #{tpu_custom_call.1} parent=11 // pred_region
          %s242 = ssub.s32 1024, 1024
          %243 = vsyncadd [#allocation6], %s242
          %s244 = sshll.u32 [#allocation7], 4
          %s245 = int_to_ptr.vmem [resolvable:$true] %s244
          %250 = dma.hbm_to_vmem [thread:$0]  %s3, 1024, %s245, [#allocation6], 64, 64, 4
        $region24: #{tpu_custom_call.1} parent=11 // pred_fallthru
          _
        // Predicated region
        $region25: #{tpu_custom_call.1} parent=11 // pred_check
          %p251 = pneg %p134
        $region26: #{tpu_custom_call.1} parent=11 // pred_check_branch
          %253 = sbr.rel (%p251) target = $region28
        $region27: #{tpu_custom_call.1} parent=11 // pred_region
          _
        $region28: #{tpu_custom_call.1} parent=11 // pred_fallthru
          _
        // Predicated region
        $region29: #{tpu_custom_call.1} parent=11 // pred_check
          %p254 = pneg %p155
        $region30: #{tpu_custom_call.1} parent=11 // pred_check_branch
          %256 = sbr.rel (%p254) target = $region32
        $region31: #{tpu_custom_call.1} parent=11 // pred_region
          _
        $region32: #{tpu_custom_call.1} parent=11 // pred_fallthru
          _
      $region12: #{tpu_custom_call.1} parent=5 // pred_fallthru
        _
      %p257 = scmp.lt.s32.totalorder %s24, 2
      // Predicated region
      $region33: #{tpu_custom_call.1} parent=5 // pred_check
        %p258 = pneg %p257
      $region34: #{tpu_custom_call.1} parent=5 // pred_check_branch
        %260 = sbr.rel (%p258) target = $region36
      $region35: #{tpu_custom_call.1} parent=5 // pred_region
        // Predicated region
        $region37: #{tpu_custom_call.1} parent=35 // pred_check
          %p261 = pneg %p44
        $region38: #{tpu_custom_call.1} parent=35 // pred_check_branch
          %263 = sbr.rel (%p261) target = $region40
        $region39: #{tpu_custom_call.1} parent=35 // pred_region
          %s264 = sand.u32 %s34, 1
          %s265 = scalar_lea.sflag [#allocation3], %s264
          %s266 = sand.u32 %s34, 1
          %s267 = smul.addr %s266, 128
          %s268 = scalar_lea.vmem [#allocation2], %s267
          %s270 = ssub.s32 2048, 2048
          %271 = vsyncadd %s265, %s270
          %s272 = smul.addr %s24, 32
          %s273 = smul.addr %s272, 64
          %s274 = scalar_lea.hbm %s0, %s273
          %s275 = sshll.u32 %s268, 4
          %s276 = int_to_ptr.vmem [resolvable:$true] %s275
          %281 = dma.hbm_to_vmem [thread:$0]  %s274, 2048, %s276, %s265, 64, 64, 4
        $region40: #{tpu_custom_call.1} parent=35 // pred_fallthru
          _
      $region36: #{tpu_custom_call.1} parent=5 // pred_fallthru
        _
      %p282 = scmp.le.s32.totalorder 1, %s24
      %p283 = scmp.lt.s32.totalorder %s24, 3
      %p284 = pnand %p282, %p283
      %p285 = pneg %p284
      // Predicated region
      $region41: #{tpu_custom_call.1} parent=5 // pred_check
        _
      $region42: #{tpu_custom_call.1} parent=5 // pred_check_branch
        %287 = sbr.rel (%p284) target = $region44
      $region43: #{tpu_custom_call.1} parent=5 // pred_region
        %s288 = ssub.s32 %s24, 1
        %s289 = sand.u32 %s37, 1
        %s290 = scalar_lea.sflag [#allocation3], %s289
        %s291 = sand.u32 %s37, 1
        %s292 = smul.addr %s291, 128
        %s293 = scalar_lea.vmem [#allocation2], %s292
        // Predicated region
        $region45: #{tpu_custom_call.1} parent=43 // pred_check
          %p294 = pneg %p50
        $region46: #{tpu_custom_call.1} parent=43 // pred_check_branch
          %296 = sbr.rel (%p294) target = $region48
        $region47: #{tpu_custom_call.1} parent=43 // pred_region
          %297 = dma.done %s290, 2048
        $region48: #{tpu_custom_call.1} parent=43 // pred_fallthru
          _
        // Predicated region
        $region49: #{tpu_custom_call.1} parent=43 // pred_check
          %p298 = pneg %p71
        $region50: #{tpu_custom_call.1} parent=43 // pred_check_branch
          %300 = sbr.rel (%p298) target = $region52
        $region51: #{tpu_custom_call.1} parent=43 // pred_region
          %301 = dma.done [#allocation6], 1024
        $region52: #{tpu_custom_call.1} parent=43 // pred_fallthru
          _
        // Predicated region
        $region53: #{tpu_custom_call.1} parent=43 // pred_check
          %p302 = pneg %p113
        $region54: #{tpu_custom_call.1} parent=43 // pred_check_branch
          %304 = sbr.rel (%p302) target = $region56
        $region55: #{tpu_custom_call.1} parent=43 // pred_region
          %305 = dma.done [#allocation6], 1024
        $region56: #{tpu_custom_call.1} parent=43 // pred_fallthru
          _
        %s306 = sand.u32 %s37, 1
        %s307 = scalar_lea.sflag [#allocation3], %s306
        %s308 = sand.u32 %s37, 1
        %s309 = smul.addr %s308, 128
        %s310 = scalar_lea.vmem [#allocation2], %s309
        %p311 = pneg %p50
        %p312 = pneg %p47
        %p313 = pneg %p71
        %p314 = pneg %p68
        %p315 = pneg %p92
        %p316 = pneg %p89
        %p317 = pneg %p113
        %p318 = pneg %p110
        %p319 = pneg %p134
        %p320 = pneg %p131
        %p321 = pneg %p155
        %p322 = pneg %p152
        %p323 = pneg %p181
        %p324 = pneg %p178
        %s325 = sand.u32 %s168, 1
        %s326 = scalar_lea.sflag [#allocation4], %s325
        %s327 = sand.u32 %s168, 1
        %s328 = scalar_lea.vmem [#allocation8], %s327
        %p329 = pneg %p207
        %p330 = pneg %p204
        %s331 = sand.u32 %s194, 1
        %s332 = scalar_lea.sflag [#allocation10], %s331
        %s333 = sand.u32 %s194, 1
        %s334 = scalar_lea.vmem [#allocation9], %s333
        %v336 = vld [vmem:[%s293] sm:$0xf]
        %v337 = vld [vmem:[%s293 + $0x4] sm:$0xf]
        %v338 = vld [vmem:[%s293 + $0x8] sm:$0xf]
        %v339 = vld [vmem:[%s293 + $0xc] sm:$0xf]
        %v340 = vld [vmem:[%s293 + $0x10] sm:$0xf]
        %v341 = vld [vmem:[%s293 + $0x14] sm:$0xf]
        %v342 = vld [vmem:[%s293 + $0x18] sm:$0xf]
        %v343 = vld [vmem:[%s293 + $0x1c] sm:$0xf]
        %v344 = vld [vmem:[%s293 + $0x20] sm:$0xf]
        %v345 = vld [vmem:[%s293 + $0x24] sm:$0xf]
        %v346 = vld [vmem:[%s293 + $0x28] sm:$0xf]
        %v347 = vld [vmem:[%s293 + $0x2c] sm:$0xf]
        %v348 = vld [vmem:[%s293 + $0x30] sm:$0xf]
        %v349 = vld [vmem:[%s293 + $0x34] sm:$0xf]
        %v350 = vld [vmem:[%s293 + $0x38] sm:$0xf]
        %v351 = vld [vmem:[%s293 + $0x3c] sm:$0xf]
        %v352 = vld [vmem:[%s293 + $0x40] sm:$0xf]
        %v353 = vld [vmem:[%s293 + $0x44] sm:$0xf]
        %v354 = vld [vmem:[%s293 + $0x48] sm:$0xf]
        %v355 = vld [vmem:[%s293 + $0x4c] sm:$0xf]
        %v356 = vld [vmem:[%s293 + $0x50] sm:$0xf]
        %v357 = vld [vmem:[%s293 + $0x54] sm:$0xf]
        %v358 = vld [vmem:[%s293 + $0x58] sm:$0xf]
        %v359 = vld [vmem:[%s293 + $0x5c] sm:$0xf]
        %v360 = vld [vmem:[%s293 + $0x60] sm:$0xf]
        %v361 = vld [vmem:[%s293 + $0x64] sm:$0xf]
        %v362 = vld [vmem:[%s293 + $0x68] sm:$0xf]
        %v363 = vld [vmem:[%s293 + $0x6c] sm:$0xf]
        %v364 = vld [vmem:[%s293 + $0x70] sm:$0xf]
        %v365 = vld [vmem:[%s293 + $0x74] sm:$0xf]
        %v366 = vld [vmem:[%s293 + $0x78] sm:$0xf]
        %v367 = vld [vmem:[%s293 + $0x7c] sm:$0xf]
        %v368 = vld [vmem:[#allocation5] sm:$0xf]
        %v369 = vld [vmem:[#allocation5 + $0x4] sm:$0xf]
        %v370 = vld [vmem:[#allocation5 + $0x8] sm:$0xf]
        %v371 = vld [vmem:[#allocation5 + $0xc] sm:$0xf]
        %v372 = vld [vmem:[#allocation5 + $0x10] sm:$0xf]
        %v373 = vld [vmem:[#allocation5 + $0x14] sm:$0xf]
        %v374 = vld [vmem:[#allocation5 + $0x18] sm:$0xf]
        %v375 = vld [vmem:[#allocation5 + $0x1c] sm:$0xf]
        %v376 = vld [vmem:[#allocation5 + $0x20] sm:$0xf]
        %v377 = vld [vmem:[#allocation5 + $0x24] sm:$0xf]
        %v378 = vld [vmem:[#allocation5 + $0x28] sm:$0xf]
        %v379 = vld [vmem:[#allocation5 + $0x2c] sm:$0xf]
        %v380 = vld [vmem:[#allocation5 + $0x30] sm:$0xf]
        %v381 = vld [vmem:[#allocation5 + $0x34] sm:$0xf]
        %v382 = vld [vmem:[#allocation5 + $0x38] sm:$0xf]
        %v383 = vld [vmem:[#allocation5 + $0x3c] sm:$0xf]
        %v384 = vld [vmem:[%s2] sm:$0x1]
        %v386 = vlaneseq
        %v387 = vshrl.u32 %v386, 7
        %v388 = vsub.s32 0, %v387
        %v389 = vrot.slane %v384, %v388
        %v423 = vunpack.c.l.b16 %v336
        %v424 = vunpack.c.l.b16 %v337
        %v425 = vunpack.c.l.b16 %v338
        %v426 = vunpack.c.l.b16 %v339
        %v427 = vunpack.c.l.b16 %v340
        %v428 = vunpack.c.l.b16 %v341
        %v429 = vunpack.c.l.b16 %v342
        %v430 = vunpack.c.l.b16 %v343
        %v431 = vunpack.c.l.b16 %v344
        %v432 = vunpack.c.l.b16 %v345
        %v433 = vunpack.c.l.b16 %v346
        %v434 = vunpack.c.l.b16 %v347
        %v435 = vunpack.c.l.b16 %v348
        %v436 = vunpack.c.l.b16 %v349
        %v437 = vunpack.c.l.b16 %v350
        %v438 = vunpack.c.l.b16 %v351
        %v439 = vunpack.c.l.b16 %v352
        %v440 = vunpack.c.l.b16 %v353
        %v441 = vunpack.c.l.b16 %v354
        %v442 = vunpack.c.l.b16 %v355
        %v443 = vunpack.c.l.b16 %v356
        %v444 = vunpack.c.l.b16 %v357
        %v445 = vunpack.c.l.b16 %v358
        %v446 = vunpack.c.l.b16 %v359
        %v447 = vunpack.c.l.b16 %v360
        %v448 = vunpack.c.l.b16 %v361
        %v449 = vunpack.c.l.b16 %v362
        %v450 = vunpack.c.l.b16 %v363
        %v451 = vunpack.c.l.b16 %v364
        %v452 = vunpack.c.l.b16 %v365
        %v453 = vunpack.c.l.b16 %v366
        %v454 = vunpack.c.l.b16 %v367
        %v455 = vpack.c.b16 %v424, %v423
        %v456 = vpack.c.b16 %v426, %v425
        %v457 = vpack.c.b16 %v428, %v427
        %v458 = vpack.c.b16 %v430, %v429
        %v459 = vpack.c.b16 %v432, %v431
        %v460 = vpack.c.b16 %v434, %v433
        %v461 = vpack.c.b16 %v436, %v435
        %v462 = vpack.c.b16 %v438, %v437
        %v463 = vpack.c.b16 %v440, %v439
        %v464 = vpack.c.b16 %v442, %v441
        %v465 = vpack.c.b16 %v444, %v443
        %v466 = vpack.c.b16 %v446, %v445
        %v467 = vpack.c.b16 %v448, %v447
        %v468 = vpack.c.b16 %v450, %v449
        %v469 = vpack.c.b16 %v452, %v451
        %v470 = vpack.c.b16 %v454, %v453
        %v503 = vunpack.c.l.b16 %v368
        %v504 = vunpack.c.l.b16 %v369
        %v505 = vunpack.c.l.b16 %v370
        %v506 = vunpack.c.l.b16 %v371
        %v507 = vunpack.c.l.b16 %v372
        %v508 = vunpack.c.l.b16 %v373
        %v509 = vunpack.c.l.b16 %v374
        %v510 = vunpack.c.l.b16 %v375
        %v511 = vunpack.c.l.b16 %v376
        %v512 = vunpack.c.l.b16 %v377
        %v513 = vunpack.c.l.b16 %v378
        %v514 = vunpack.c.l.b16 %v379
        %v515 = vunpack.c.l.b16 %v380
        %v516 = vunpack.c.l.b16 %v381
        %v517 = vunpack.c.l.b16 %v382
        %v518 = vunpack.c.l.b16 %v383
        %v519 = vpack.c.b16 %v504, %v503
        %v520 = vpack.c.b16 %v506, %v505
        %v521 = vpack.c.b16 %v508, %v507
        %v522 = vpack.c.b16 %v510, %v509
        %v523 = vpack.c.b16 %v512, %v511
        %v524 = vpack.c.b16 %v514, %v513
        %v525 = vpack.c.b16 %v516, %v515
        %v526 = vpack.c.b16 %v518, %v517
        %535 = vmatprep.subr.bf16.mxu0 0
        %536 = vmatpush1.bf16.msra.mxu0 %v519
        %537 = vmatprep.subr.bf16.mxu0 0
        %538 = vmatpush1.bf16.msra.mxu0 %v520
        %539 = vmatprep.subr.bf16.mxu0 0
        %540 = vmatpush1.bf16.msra.mxu0 %v521
        %541 = vmatprep.subr.bf16.mxu0 0
        %542 = vmatpush1.bf16.msra.mxu0 %v522
        %543 = vmatprep.subr.bf16.mxu0 0
        %544 = vmatpush1.bf16.msra.mxu0 %v523
        %545 = vmatprep.subr.bf16.mxu0 0
        %546 = vmatpush1.bf16.msra.mxu0 %v524
        %547 = vmatprep.subr.bf16.mxu0 0
        %548 = vmatpush1.bf16.msra.mxu0 %v525
        %549 = vmatprep.subr.bf16.mxu0 0
        %550 = vmatpush1.bf16.msra.mxu0 %v526
        %551 = vmatprep.subr.bf16.mxu0 0
        %552 = vmatpush1.bf16.msra.mxu0 0
        %553 = vmatprep.subr.bf16.mxu0 0
        %554 = vmatpush1.bf16.msra.mxu0 0
        %555 = vmatprep.subr.bf16.mxu0 0
        %556 = vmatpush1.bf16.msra.mxu0 0
        %557 = vmatprep.subr.bf16.mxu0 0
        %558 = vmatpush1.bf16.msra.mxu0 0
        %559 = vmatprep.subr.bf16.mxu0 0
        %560 = vmatpush1.bf16.msra.mxu0 0
        %561 = vmatprep.subr.bf16.mxu0 0
        %562 = vmatpush1.bf16.msra.mxu0 0
        %563 = vmatprep.subr.bf16.mxu0 0
        %564 = vmatpush1.bf16.msra.mxu0 0
        %565 = vmatprep.subr.bf16.mxu0 0
        %566 = vmatpush1.bf16.msra.mxu0 0
        %567 = vmatprep.mubr.bf16.mxu0 0
        %568 = vmatmul.mubr.bf16.gmra.mrb[0].mxu0 %v455
        %v569 = vpop.f32.mrb[0].mxu0
        %v570 = vadd.f32 %v389, %v569
        %v571 = vpop.f32.mrb[0].mxu0
        %v572 = vpop.f32.mrb[0].mxu0
        %v573 = vadd.f32 %v389, %v572
        %v574 = vpop.f32.mrb[0].mxu0
        %575 = vmatprep.mubr.bf16.mxu0 0
        %576 = vmatmul.mubr.bf16.gmra.mrb[0].mxu0 %v456
        %v577 = vpop.f32.mrb[0].mxu0
        %v578 = vadd.f32 %v389, %v577
        %v579 = vpop.f32.mrb[0].mxu0
        %v580 = vpop.f32.mrb[0].mxu0
        %v581 = vadd.f32 %v389, %v580
        %v582 = vpop.f32.mrb[0].mxu0
        %583 = vmatprep.mubr.bf16.mxu0 0
        %584 = vmatmul.mubr.bf16.gmra.mrb[0].mxu0 %v457
        %v585 = vpop.f32.mrb[0].mxu0
        %v586 = vadd.f32 %v389, %v585
        %v587 = vpop.f32.mrb[0].mxu0
        %v588 = vpop.f32.mrb[0].mxu0
        %v589 = vadd.f32 %v389, %v588
        %v590 = vpop.f32.mrb[0].mxu0
        %591 = vmatprep.mubr.bf16.mxu0 0
        %592 = vmatmul.mubr.bf16.gmra.mrb[0].mxu0 %v458
        %v593 = vpop.f32.mrb[0].mxu0
        %v594 = vadd.f32 %v389, %v593
        %v595 = vpop.f32.mrb[0].mxu0
        %v596 = vpop.f32.mrb[0].mxu0
        %v597 = vadd.f32 %v389, %v596
        %v598 = vpop.f32.mrb[0].mxu0
        %599 = vmatprep.mubr.bf16.mxu0 0
        %600 = vmatmul.mubr.bf16.gmra.mrb[0].mxu0 %v459
        %v601 = vpop.f32.mrb[0].mxu0
        %v602 = vadd.f32 %v389, %v601
        %v603 = vpop.f32.mrb[0].mxu0
        %v604 = vpop.f32.mrb[0].mxu0
        %v605 = vadd.f32 %v389, %v604
        %v606 = vpop.f32.mrb[0].mxu0
        %607 = vmatprep.mubr.bf16.mxu0 0
        %608 = vmatmul.mubr.bf16.gmra.mrb[0].mxu0 %v460
        %v609 = vpop.f32.mrb[0].mxu0
        %v610 = vadd.f32 %v389, %v609
        %v611 = vpop.f32.mrb[0].mxu0
        %v612 = vpop.f32.mrb[0].mxu0
        %v613 = vadd.f32 %v389, %v612
        %v614 = vpop.f32.mrb[0].mxu0
        %615 = vmatprep.mubr.bf16.mxu0 0
        %616 = vmatmul.mubr.bf16.gmra.mrb[0].mxu0 %v461
        %v617 = vpop.f32.mrb[0].mxu0
        %v618 = vadd.f32 %v389, %v617
        %v619 = vpop.f32.mrb[0].mxu0
        %v620 = vpop.f32.mrb[0].mxu0
        %v621 = vadd.f32 %v389, %v620
        %v622 = vpop.f32.mrb[0].mxu0
        %623 = vmatprep.mubr.bf16.mxu0 0
        %624 = vmatmul.mubr.bf16.gmra.mrb[0].mxu0 %v462
        %v625 = vpop.f32.mrb[0].mxu0
        %v626 = vadd.f32 %v389, %v625
        %v627 = vpop.f32.mrb[0].mxu0
        %v628 = vpop.f32.mrb[0].mxu0
        %v629 = vadd.f32 %v389, %v628
        %v630 = vpop.f32.mrb[0].mxu0
        %631 = vmatprep.mubr.bf16.mxu0 0
        %632 = vmatmul.mubr.bf16.gmra.mrb[0].mxu0 %v463
        %v633 = vpop.f32.mrb[0].mxu0
        %v634 = vadd.f32 %v389, %v633
        %v635 = vpop.f32.mrb[0].mxu0
        %v636 = vpop.f32.mrb[0].mxu0
        %v637 = vadd.f32 %v389, %v636
        %v638 = vpop.f32.mrb[0].mxu0
        %639 = vmatprep.mubr.bf16.mxu0 0
        %640 = vmatmul.mubr.bf16.gmra.mrb[0].mxu0 %v464
        %v641 = vpop.f32.mrb[0].mxu0
        %v642 = vadd.f32 %v389, %v641
        %v643 = vpop.f32.mrb[0].mxu0
        %v644 = vpop.f32.mrb[0].mxu0
        %v645 = vadd.f32 %v389, %v644
        %v646 = vpop.f32.mrb[0].mxu0
        %647 = vmatprep.mubr.bf16.mxu0 0
        %648 = vmatmul.mubr.bf16.gmra.mrb[0].mxu0 %v465
        %v649 = vpop.f32.mrb[0].mxu0
        %v650 = vadd.f32 %v389, %v649
        %v651 = vpop.f32.mrb[0].mxu0
        %v652 = vpop.f32.mrb[0].mxu0
        %v653 = vadd.f32 %v389, %v652
        %v654 = vpop.f32.mrb[0].mxu0
        %655 = vmatprep.mubr.bf16.mxu0 0
        %656 = vmatmul.mubr.bf16.gmra.mrb[0].mxu0 %v466
        %v657 = vpop.f32.mrb[0].mxu0
        %v658 = vadd.f32 %v389, %v657
        %v659 = vpop.f32.mrb[0].mxu0
        %v660 = vpop.f32.mrb[0].mxu0
        %v661 = vadd.f32 %v389, %v660
        %v662 = vpop.f32.mrb[0].mxu0
        %663 = vmatprep.mubr.bf16.mxu0 0
        %664 = vmatmul.mubr.bf16.gmra.mrb[0].mxu0 %v467
        %v665 = vpop.f32.mrb[0].mxu0
        %v666 = vadd.f32 %v389, %v665
        %v667 = vpop.f32.mrb[0].mxu0
        %v668 = vpop.f32.mrb[0].mxu0
        %v669 = vadd.f32 %v389, %v668
        %v670 = vpop.f32.mrb[0].mxu0
        %671 = vmatprep.mubr.bf16.mxu0 0
        %672 = vmatmul.mubr.bf16.gmra.mrb[0].mxu0 %v468
        %v673 = vpop.f32.mrb[0].mxu0
        %v674 = vadd.f32 %v389, %v673
        %v675 = vpop.f32.mrb[0].mxu0
        %v676 = vpop.f32.mrb[0].mxu0
        %v677 = vadd.f32 %v389, %v676
        %v678 = vpop.f32.mrb[0].mxu0
        %679 = vmatprep.mubr.bf16.mxu0 0
        %680 = vmatmul.mubr.bf16.gmra.mrb[0].mxu0 %v469
        %v681 = vpop.f32.mrb[0].mxu0
        %v682 = vadd.f32 %v389, %v681
        %v683 = vpop.f32.mrb[0].mxu0
        %v684 = vpop.f32.mrb[0].mxu0
        %v685 = vadd.f32 %v389, %v684
        %v686 = vpop.f32.mrb[0].mxu0
        %687 = vmatprep.mubr.bf16.mxu0 0
        %688 = vmatmul.mubr.bf16.gmra.mrb[0].mxu0 %v470
        %v689 = vpop.f32.mrb[0].mxu0
        %v690 = vadd.f32 %v389, %v689
        %v691 = vpop.f32.mrb[0].mxu0
        %v692 = vpop.f32.mrb[0].mxu0
        %v693 = vadd.f32 %v389, %v692
        %v694 = vpop.f32.mrb[0].mxu0
        %695 = vdwg.mxu0
        %v696 = vmax.f32 %v570, 0.0
        %v697 = vmax.f32 %v573, 0.0
        %v698 = vmax.f32 %v578, 0.0
        %v699 = vmax.f32 %v581, 0.0
        %v700 = vmax.f32 %v586, 0.0
        %v701 = vmax.f32 %v589, 0.0
        %v702 = vmax.f32 %v594, 0.0
        %v703 = vmax.f32 %v597, 0.0
        %v704 = vmax.f32 %v602, 0.0
        %v705 = vmax.f32 %v605, 0.0
        %v706 = vmax.f32 %v610, 0.0
        %v707 = vmax.f32 %v613, 0.0
        %v708 = vmax.f32 %v618, 0.0
        %v709 = vmax.f32 %v621, 0.0
        %v710 = vmax.f32 %v626, 0.0
        %v711 = vmax.f32 %v629, 0.0
        %v712 = vmax.f32 %v634, 0.0
        %v713 = vmax.f32 %v637, 0.0
        %v714 = vmax.f32 %v642, 0.0
        %v715 = vmax.f32 %v645, 0.0
        %v716 = vmax.f32 %v650, 0.0
        %v717 = vmax.f32 %v653, 0.0
        %v718 = vmax.f32 %v658, 0.0
        %v719 = vmax.f32 %v661, 0.0
        %v720 = vmax.f32 %v666, 0.0
        %v721 = vmax.f32 %v669, 0.0
        %v722 = vmax.f32 %v674, 0.0
        %v723 = vmax.f32 %v677, 0.0
        %v724 = vmax.f32 %v682, 0.0
        %v725 = vmax.f32 %v685, 0.0
        %v726 = vmax.f32 %v690, 0.0
        %v727 = vmax.f32 %v693, 0.0
        %v728 = vld [vmem:[%s5] sm:$0x3]
        %v729 = vpack.c.bf16 %v697, %v696
        %v730 = vpack.c.bf16 %v699, %v698
        %v731 = vpack.c.bf16 %v701, %v700
        %v732 = vpack.c.bf16 %v703, %v702
        %v733 = vpack.c.bf16 %v705, %v704
        %v734 = vpack.c.bf16 %v707, %v706
        %v735 = vpack.c.bf16 %v709, %v708
        %v736 = vpack.c.bf16 %v711, %v710
        %v737 = vpack.c.bf16 %v713, %v712
        %v738 = vpack.c.bf16 %v715, %v714
        %v739 = vpack.c.bf16 %v717, %v716
        %v740 = vpack.c.bf16 %v719, %v718
        %v741 = vpack.c.bf16 %v721, %v720
        %v742 = vpack.c.bf16 %v723, %v722
        %v743 = vpack.c.bf16 %v725, %v724
        %v744 = vpack.c.bf16 %v727, %v726
        %v747 = vunpack.c.l.s4 1966171168
        %v748 = vunpack.c.0.s8 %v747
        %v749 = vlaneseq
        %v750 = vshrl.u32 %v749, 7
        %v751 = vsub.s32 %v748, %v750
        %v752 = vrot.slane %v728, %v751
        %v753 = vcombine.high %v752, %v752
        %v755 = vunpack.c.l.s4 1966171168
        %v756 = vunpack.c.0.s8 %v755
        %v757 = vlaneseq
        %v758 = vshrl.u32 %v757, 7
        %v759 = vsub.s32 %v756, %v758
        %v760 = vrot.slane %v752, %v759
        %v762 = vunpack.c.l.s4 1966171168
        %v763 = vunpack.c.0.s8 %v762
        %v764 = vlaneseq
        %v765 = vshrl.u32 %v764, 7
        %v766 = vsub.s32 %v763, %v765
        %v767 = vrot.slane %v753, %v766
        %770 = vmatprep.subr.bf16.mxu0 0
        %771 = vmatpush1.bf16.msra.mxu0 %v729
        %772 = vmatprep.subr.bf16.mxu0 0
        %773 = vmatpush1.bf16.msra.mxu0 %v730
        %774 = vmatprep.subr.bf16.mxu0 0
        %775 = vmatpush1.bf16.msra.mxu0 %v731
        %776 = vmatprep.subr.bf16.mxu0 0
        %777 = vmatpush1.bf16.msra.mxu0 %v732
        %778 = vmatprep.subr.bf16.mxu0 0
        %779 = vmatpush1.bf16.msra.mxu0 %v733
        %780 = vmatprep.subr.bf16.mxu0 0
        %781 = vmatpush1.bf16.msra.mxu0 %v734
        %782 = vmatprep.subr.bf16.mxu0 0
        %783 = vmatpush1.bf16.msra.mxu0 %v735
        %784 = vmatprep.subr.bf16.mxu0 0
        %785 = vmatpush1.bf16.msra.mxu0 %v736
        %786 = vmatprep.subr.bf16.mxu0 0
        %787 = vmatpush1.bf16.msra.mxu0 %v737
        %788 = vmatprep.subr.bf16.mxu0 0
        %789 = vmatpush1.bf16.msra.mxu0 %v738
        %790 = vmatprep.subr.bf16.mxu0 0
        %791 = vmatpush1.bf16.msra.mxu0 %v739
        %792 = vmatprep.subr.bf16.mxu0 0
        %793 = vmatpush1.bf16.msra.mxu0 %v740
        %794 = vmatprep.subr.bf16.mxu0 0
        %795 = vmatpush1.bf16.msra.mxu0 %v741
        %796 = vmatprep.subr.bf16.mxu0 0
        %797 = vmatpush1.bf16.msra.mxu0 %v742
        %798 = vmatprep.subr.bf16.mxu0 0
        %799 = vmatpush1.bf16.msra.mxu0 %v743
        %800 = vmatprep.subr.bf16.mxu0 0
        %801 = vmatpush1.bf16.msra.mxu0 %v744
        %802 = vmatprep.mubr.bf16.mxu0 %v767
        %803 = vmatmul.mubr.bf16.gmra.mrb[0].mxu0 %v760
        %v804 = vpop.f32.mrb[0].mxu0
        %v805 = vadd.f32 0.0, %v804
        %v806 = vpop.f32.mrb[0].mxu0
        %v807 = vpop.f32.mrb[0].mxu0
        %v808 = vpop.f32.mrb[0].mxu0
        %809 = vdwg.mxu0
        %v810 = vmul.f32 %v805, 0.00390625
        %811 = vst [vmem:[%s334] sm:$0x1] %v810
        %v812 = vpack.c.bf16 %v810, %v810
        %v813 = vld [vmem:[#allocation7] sm:$0xf]
        %v814 = vld [vmem:[#allocation7 + $0x4] sm:$0xf]
        %v815 = vld [vmem:[#allocation7 + $0x8] sm:$0xf]
        %v816 = vld [vmem:[#allocation7 + $0xc] sm:$0xf]
        %v817 = vld [vmem:[#allocation7 + $0x10] sm:$0xf]
        %v818 = vld [vmem:[#allocation7 + $0x14] sm:$0xf]
        %v819 = vld [vmem:[#allocation7 + $0x18] sm:$0xf]
        %v820 = vld [vmem:[#allocation7 + $0x1c] sm:$0xf]
        %v821 = vld [vmem:[#allocation7 + $0x20] sm:$0xf]
        %v822 = vld [vmem:[#allocation7 + $0x24] sm:$0xf]
        %v823 = vld [vmem:[#allocation7 + $0x28] sm:$0xf]
        %v824 = vld [vmem:[#allocation7 + $0x2c] sm:$0xf]
        %v825 = vld [vmem:[#allocation7 + $0x30] sm:$0xf]
        %v826 = vld [vmem:[#allocation7 + $0x34] sm:$0xf]
        %v827 = vld [vmem:[#allocation7 + $0x38] sm:$0xf]
        %v828 = vld [vmem:[#allocation7 + $0x3c] sm:$0xf]
        %v829 = vld [vmem:[%s4] sm:$0x1]
        %v846 = vunpack.c.l.b16 %v813
        %v847 = vunpack.c.l.b16 %v814
        %v848 = vunpack.c.l.b16 %v815
        %v849 = vunpack.c.l.b16 %v816
        %v850 = vunpack.c.l.b16 %v817
        %v851 = vunpack.c.l.b16 %v818
        %v852 = vunpack.c.l.b16 %v819
        %v853 = vunpack.c.l.b16 %v820
        %v854 = vunpack.c.l.b16 %v821
        %v855 = vunpack.c.l.b16 %v822
        %v856 = vunpack.c.l.b16 %v823
        %v857 = vunpack.c.l.b16 %v824
        %v858 = vunpack.c.l.b16 %v825
        %v859 = vunpack.c.l.b16 %v826
        %v860 = vunpack.c.l.b16 %v827
        %v861 = vunpack.c.l.b16 %v828
        %v862 = vpack.c.b16 %v847, %v846
        %v863 = vpack.c.b16 %v849, %v848
        %v864 = vpack.c.b16 %v851, %v850
        %v865 = vpack.c.b16 %v853, %v852
        %v866 = vpack.c.b16 %v855, %v854
        %v867 = vpack.c.b16 %v857, %v856
        %v868 = vpack.c.b16 %v859, %v858
        %v869 = vpack.c.b16 %v861, %v860
        %878 = vmatprep.subr.bf16.mxu0 0
        %879 = vmatpush1.bf16.msra.mxu0 %v862
        %880 = vmatprep.subr.bf16.mxu0 0
        %881 = vmatpush1.bf16.msra.mxu0 %v863
        %882 = vmatprep.subr.bf16.mxu0 0
        %883 = vmatpush1.bf16.msra.mxu0 %v864
        %884 = vmatprep.subr.bf16.mxu0 0
        %885 = vmatpush1.bf16.msra.mxu0 %v865
        %886 = vmatprep.subr.bf16.mxu0 0
        %887 = vmatpush1.bf16.msra.mxu0 %v866
        %888 = vmatprep.subr.bf16.mxu0 0
        %889 = vmatpush1.bf16.msra.mxu0 %v867
        %890 = vmatprep.subr.bf16.mxu0 0
        %891 = vmatpush1.bf16.msra.mxu0 %v868
        %892 = vmatprep.subr.bf16.mxu0 0
        %893 = vmatpush1.bf16.msra.mxu0 %v869
        %894 = vmatprep.subr.bf16.mxu0 0
        %895 = vmatpush1.bf16.msra.mxu0 0
        %896 = vmatprep.subr.bf16.mxu0 0
        %897 = vmatpush1.bf16.msra.mxu0 0
        %898 = vmatprep.subr.bf16.mxu0 0
        %899 = vmatpush1.bf16.msra.mxu0 0
        %900 = vmatprep.subr.bf16.mxu0 0
        %901 = vmatpush1.bf16.msra.mxu0 0
        %902 = vmatprep.subr.bf16.mxu0 0
        %903 = vmatpush1.bf16.msra.mxu0 0
        %904 = vmatprep.subr.bf16.mxu0 0
        %905 = vmatpush1.bf16.msra.mxu0 0
        %906 = vmatprep.subr.bf16.mxu0 0
        %907 = vmatpush1.bf16.msra.mxu0 0
        %908 = vmatprep.subr.bf16.mxu0 0
        %909 = vmatpush1.bf16.msra.mxu0 0
        %910 = vmatprep.mubr.bf16.mxu0 0
        %911 = vmatmul.mubr.bf16.gmra.mrb[0].mxu0 %v812
        %v912 = vpop.f32.mrb[0].mxu0
        %v913 = vadd.f32 %v829, %v912
        %v914 = vpop.f32.mrb[0].mxu0
        %v915 = vpop.f32.mrb[0].mxu0
        %v916 = vpop.f32.mrb[0].mxu0
        %917 = vdwg.mxu0
        %v918 = vlaneseq
        %v919 = vand.u32 %v918, 127
        %vm920 = vcmp.lt.s32.totalorder %v919, 8
        %v921 = vsel %vm920, %v913, -1e+30
        %vm922 = vcmask 1040384
        %v923 = vsel %vm922, %v921, -inf
        %924 = vmax.xlane.f32.xlu0 %v923
        %v925 = vpop.xlane.xlu0 %924
        %v926 = vsub.f32 %v921, %v925
        %v927 = vmul.f32 %v926, 1.442695
        %v928 = vpow.pop %v927
        %v929 = vsel %vm922, %v928, 0.0
        %930 = vadd.xlane.f32.xlu0 %v929
        %v931 = vpop.xlane.xlu0 %930
        %v932 = vrcp.pop %v931
        %v933 = vmul.f32 %v928, %v932
        %934 = vst [vmem:[%s328] sm:$0x1] %v933
        %s935 = sand.u32 %s168, 1
        %s936 = scalar_lea.sflag [#allocation4], %s935
        %s937 = sand.u32 %s168, 1
        %s938 = scalar_lea.vmem [#allocation8], %s937
        %s939 = sand.u32 %s194, 1
        %s940 = scalar_lea.sflag [#allocation10], %s939
        %s941 = sand.u32 %s194, 1
        %s942 = scalar_lea.vmem [#allocation9], %s941
        // Predicated region
        $region57: #{tpu_custom_call.1} parent=43 // pred_check
          %p943 = pneg %p178
        $region58: #{tpu_custom_call.1} parent=43 // pred_check_branch
          %945 = sbr.rel (%p943) target = $region60
        $region59: #{tpu_custom_call.1} parent=43 // pred_region
          %s947 = ssub.s32 16, 16
          %948 = vsyncadd %s936, %s947
          %s949 = smul.addr %s29, 16
          %s950 = scalar_lea.hbm %s6, %s949
          %s952 = sshll.u32 %s938, 4
          %s953 = int_to_ptr.vmem [resolvable:$true] %s952
          %955 = dma.vmem_to_hbm [thread:$0]  %s953, 16, %s950, %s936
        $region60: #{tpu_custom_call.1} parent=43 // pred_fallthru
          _
        // Predicated region
        $region61: #{tpu_custom_call.1} parent=43 // pred_check
          %p956 = pneg %p204
        $region62: #{tpu_custom_call.1} parent=43 // pred_check_branch
          %958 = sbr.rel (%p956) target = $region64
        $region63: #{tpu_custom_call.1} parent=43 // pred_region
          %s960 = ssub.s32 16, 16
          %961 = vsyncadd %s940, %s960
          %s962 = smul.addr %s29, 16
          %s963 = scalar_lea.hbm %s7, %s962
          %s965 = sshll.u32 %s942, 4
          %s966 = int_to_ptr.vmem [resolvable:$true] %s965
          %968 = dma.vmem_to_hbm [thread:$0]  %s966, 16, %s963, %s940
        $region64: #{tpu_custom_call.1} parent=43 // pred_fallthru
          _
      $region44: #{tpu_custom_call.1} parent=5 // pred_fallthru
        _
      %p969 = scmp.le.s32.totalorder 2, %s24
      // Predicated region
      $region65: #{tpu_custom_call.1} parent=5 // pred_check
        %p970 = pneg %p969
      $region66: #{tpu_custom_call.1} parent=5 // pred_check_branch
        %972 = sbr.rel (%p970) target = $region68
      $region67: #{tpu_custom_call.1} parent=5 // pred_region
        %s973 = ssub.s32 %s24, 2
        // Predicated region
        $region69: #{tpu_custom_call.1} parent=67 // pred_check
          %p974 = pneg %p184
        $region70: #{tpu_custom_call.1} parent=67 // pred_check_branch
          %976 = sbr.rel (%p974) target = $region72
        $region71: #{tpu_custom_call.1} parent=67 // pred_region
          %s977 = sand.u32 %s169, 1
          %s978 = scalar_lea.sflag [#allocation4], %s977
          %s979 = sand.u32 %s169, 1
          %s980 = scalar_lea.vmem [#allocation8], %s979
          %981 = dma.done %s978, 16
        $region72: #{tpu_custom_call.1} parent=67 // pred_fallthru
          _
        // Predicated region
        $region73: #{tpu_custom_call.1} parent=67 // pred_check
          %p982 = pneg %p210
        $region74: #{tpu_custom_call.1} parent=67 // pred_check_branch
          %984 = sbr.rel (%p982) target = $region76
        $region75: #{tpu_custom_call.1} parent=67 // pred_region
          %s985 = sand.u32 %s195, 1
          %s986 = scalar_lea.sflag [#allocation10], %s985
          %s987 = sand.u32 %s195, 1
          %s988 = scalar_lea.vmem [#allocation9], %s987
          %989 = dma.done %s986, 16
        $region76: #{tpu_custom_call.1} parent=67 // pred_fallthru
          _
      $region68: #{tpu_custom_call.1} parent=5 // pred_fallthru
        _
    $region6: #{tpu_custom_call.1} parent=1 // loop_footer
      %s28 = sadd.s32 1, %s24
    $region7: #{tpu_custom_call.1} parent=1 // loop_footer_branch
      %23 = sbr.rel target = $region3
    $region8: #{tpu_custom_call.1} parent=1 // loop_exit
      _
    %990 = vsyncpa [#allocation3], 1
    %s991 = scalar_lea.sflag [#allocation3], 1
    %992 = vsyncpa %s991, 1
    %993 = vsyncpa [#allocation6], 1
    %994 = vsyncpa [#allocation4], 1
    %s995 = scalar_lea.sflag [#allocation4], 1
    %996 = vsyncpa %s995, 1
    %997 = vsyncpa [#allocation10], 1
    %s998 = scalar_lea.sflag [#allocation10], 1
    %999 = vsyncpa %s998, 1

</llo_original>
